<compile_context>
chip_gen: v7x
topology: tpu7x:2x2x1
jax: 0.10.0
libtpu: 0.0.40
codegen_flags: <defaults>
</compile_context>

<pallas_src>
import jax
import jax.numpy as jnp
from jax.experimental import pallas as pl
from jax.experimental.pallas import tpu as pltpu


def _round_up(x, m):
    return ((x + m - 1) // m) * m


def _bias_offsets(channels):
    """8-aligned start offset of each layer's bias inside the stacked slab."""
    offs, o = [], 0
    for c in channels[1:]:
        offs.append(o)
        o += _round_up(c, 8)
    return offs, o


def _make_mlp_kernel(channels, compute_dtype):
    """channels = [3, C1, ..., Cn, feature_dim]; n_hidden = len(channels)-2."""
    n_hidden = len(channels) - 2
    offs, _ = _bias_offsets(channels)

    def kernel(x_ref, *rest):
        # rest = (w0, w1, ..., w_{n_hidden-1}, w_last, b_all, out)
        #   x_ref  (1, 3, tn)  rows: x, y, score      (f32, points on lanes)
        #   w0     (C1, 3)     f32 (VPU layer)
        #   w_i    (C_{i+1}, C_i)  compute_dtype      (MXU layers)
        #   b_all  (sum round_up(C,8), 1) f32         (all folded biases)
        w_refs = rest[:n_hidden + 1]
        b_all = rest[n_hidden + 1]
        out_ref = rest[n_hidden + 2]

        x = x_ref[0]                       # (3, tn) f32
        w0 = w_refs[0][...]                # (C1, 3) f32

        # Layer 0: K=3 contraction on the VPU as broadcast FMAs.
        # This also fuses torch.cat([kpts^T, scores[:, None]], dim=1).
        c1 = channels[1]
        b0 = b_all[offs[0]:offs[0] + c1, :]
        y = (w0[:, 0:1] * x[0:1, :]
             + w0[:, 1:2] * x[1:2, :]
             + w0[:, 2:3] * x[2:3, :]
             + b0)
        h = jnp.maximum(y, 0.0).astype(compute_dtype)   # ReLU (BN folded)

        # Hidden layers 1..n_hidden-1: bf16 MXU matmul, f32 accumulate.
        for i in range(1, n_hidden):
            c = channels[i + 1]
            w = w_refs[i][...]
            b = b_all[offs[i]:offs[i] + c, :]
            y = jnp.dot(w, h, preferred_element_type=jnp.float32) + b
            h = jnp.maximum(y, 0.0).astype(compute_dtype)

        # Final layer (no BN / ReLU).
        fdim = channels[-1]
        w = w_refs[n_hidden][...]
        b = b_all[offs[n_hidden]:offs[n_hidden] + fdim, :]
        out_ref[0] = (jnp.dot(w, h, preferred_element_type=jnp.float32) + b
                      ).astype(out_ref.dtype)

    return kernel


def init_keypoint_encoder_params(key, feature_dim, layers):
    """Deterministic parameter init matching the module's shapes.

    Conv1d(Cin, Cout, k=1): weight stored as (Cin, Cout); bias as (1, Cout).
    BatchNorm1d(C) eval: gamma/beta/running_mean/running_var, eps=1e-5.
    """
    channels = [3] + list(layers) + [feature_dim]
    eps = 1e-5
    hidden = []
    for i in range(1, len(channels) - 1):
        cin, cout = channels[i - 1], channels[i]
        key, kw, kb, kg, kbe, km, kv = jax.random.split(key, 7)
        w = 0.1 * jax.random.normal(kw, (cin, cout), jnp.float32)
        b = 0.1 * jax.random.normal(kb, (1, cout), jnp.float32)
        gamma = 1.0 + 0.1 * jax.random.normal(kg, (1, cout), jnp.float32)
        beta = 0.1 * jax.random.normal(kbe, (1, cout), jnp.float32)
        rmean = 0.1 * jax.random.normal(km, (1, cout), jnp.float32)
        rvar = jax.random.uniform(kv, (1, cout), jnp.float32, 0.5, 1.5)
        scale = gamma / jnp.sqrt(rvar + eps)
        shift = beta - rmean * scale
        hidden.append((w, b, scale, shift))
    cin, cout = channels[-2], channels[-1]
    key, kw = jax.random.split(key)
    w_last = 0.1 * jax.random.normal(kw, (cin, cout), jnp.float32)
    b_last = jnp.zeros((1, cout), jnp.float32)   # nn.init.constant_(bias, 0.0)
    return {"hidden": hidden, "last": (w_last, b_last)}


def keypoint_encoder_forward(kpts, scores, params, *, tn=2048,
                             compute_dtype=jnp.bfloat16,
                             out_dtype=jnp.float32):
    """kpts (B, N, 2), scores (B, N) -> (B, feature_dim, N) (torch layout)."""
    B, N, _ = kpts.shape
    hidden = params["hidden"]
    n_hidden = len(hidden)
    assert n_hidden >= 1, "expects at least one (conv+bn+relu) block"
    w_last, b_last = params["last"]
    feature_dim = w_last.shape[1]
    channels = [3] + [w.shape[1] for (w, _, _, _) in hidden] + [feature_dim]

    # Point tiling: large tile amortizes per-grid-step and MXU fill/drain cost;
    # clamp to the 128-padded point count; with B == 1 keep >= 2 point tiles so
    # both v7x TensorCores get work (free on v5e/v6e).
    n_pad128 = _round_up(N, 128)
    tn = min(tn, n_pad128)
    if B == 1 and n_pad128 >= 256:
        tn = min(tn, _round_up(n_pad128 // 2, 128))
    n_pad = _round_up(N, tn)

    # Single channels-first input slab (B, 3, n_pad): rows = x, y, score.
    x = jnp.concatenate(
        [jnp.swapaxes(kpts.astype(jnp.float32), 1, 2),
         scores.astype(jnp.float32)[:, None, :]], axis=1)          # (B, 3, N)
    if n_pad != N:
        x = jnp.pad(x, ((0, 0), (0, 0), (0, n_pad - N)))

    # Fold conv bias + eval BatchNorm into the matmul:
    #   ((x @ w + b) * s + t) == x @ (w*s) + (b*s + t)
    # Weights transposed to (Cout, Cin) for channels-first.  Hidden/final
    # weights pre-cast to compute_dtype (bf16 -> native MXU); layer 0 stays f32
    # (it runs on the VPU).  Biases stay f32 (added to the f32 accumulator) and
    # are stacked into one slab with 8-aligned segments.
    weight_list, bias_segs = [], []
    for li, (w, b, s, t) in enumerate(hidden):
        wf = (w * s).T
        weight_list.append(wf if li == 0 else wf.astype(compute_dtype))
        bias_segs.append((b * s + t).reshape(-1, 1))
    weight_list.append(w_last.T.astype(compute_dtype))
    bias_segs.append(b_last.reshape(-1, 1))

    padded = []
    for seg in bias_segs:
        pad = (-seg.shape[0]) % 8
        padded.append(jnp.pad(seg, ((0, pad), (0, 0))) if pad else seg)
    b_all = jnp.concatenate(padded, axis=0).astype(jnp.float32)

    kernel = _make_mlp_kernel(channels, compute_dtype)

    def const_spec(arr):
        # Grid-invariant parameter: single-buffered, never re-fetched.
        return pl.BlockSpec(arr.shape, lambda b, j: (0, 0),
                            pipeline_mode=pl.Buffered(1))

    in_specs = [pl.BlockSpec((1, 3, tn), lambda b, j: (b, 0, j))]
    in_specs += [const_spec(w) for w in weight_list]
    in_specs.append(const_spec(b_all))

    out = pl.pallas_call(
        kernel,
        out_shape=jax.ShapeDtypeStruct((B, feature_dim, n_pad), out_dtype),
        grid_spec=pltpu.PrefetchScalarGridSpec(
            num_scalar_prefetch=0,
            grid=(B, n_pad // tn),
            in_specs=in_specs,
            out_specs=pl.BlockSpec((1, feature_dim, tn), lambda b, j: (b, 0, j)),
        ),
        compiler_params=pltpu.CompilerParams(
            dimension_semantics=("parallel", "parallel")),
    )(x, *weight_list, b_all)

    # Kernel already produced torch layout (B, F, n_pad); drop point padding.
    return out[:, :, :N] if n_pad != N else out


def _reference_forward(kpts, scores, params):
    """Unfolded channels-last f32 reference matching PyTorch eval semantics."""
    x = jnp.concatenate([kpts, scores[..., None]], axis=-1).astype(jnp.float32)
    B, N, _ = x.shape
    h = x.reshape(B * N, 3)
    for (w, b, s, t) in params["hidden"]:
        h = jnp.maximum((h @ w + b) * s + t, 0.0)
    w, b = params["last"]
    h = h @ w + b
    return h.reshape(B, N, -1).transpose(0, 2, 1)


if __name__ == "__main__":
    B, N = 2, 8
    feature_dim, layers = 32, [8, 16]

    key = jax.random.PRNGKey(0)
    k_par, k_kpt, k_sc = jax.random.split(key, 3)
    params = init_keypoint_encoder_params(k_par, feature_dim, layers)
    kpts = jax.random.uniform(k_kpt, (B, N, 2), jnp.float32)    # (x, y) coords
    scores = jax.random.uniform(k_sc, (B, N), jnp.float32)      # detection scores

    ref = _reference_forward(kpts, scores, params)

    # Exact-parity path: f32 matmuls, matches PyTorch eval numerics.
    out_f32 = keypoint_encoder_forward(kpts, scores, params,
                                       compute_dtype=jnp.float32)
    out_f32 = jax.block_until_ready(out_f32)
    assert out_f32.shape == (B, feature_dim, N), out_f32.shape
    assert jnp.allclose(out_f32, ref, atol=1e-4, rtol=1e-4), "f32 path mismatch"

    # Fast (default) path: bf16 MXU matmuls with f32 accumulation.
    out_bf = keypoint_encoder_forward(kpts, scores, params)
    out_bf = jax.block_until_ready(out_bf)
    assert out_bf.shape == (B, feature_dim, N), out_bf.shape
    assert jnp.allclose(out_bf, ref, atol=5e-2, rtol=5e-2), "bf16 path mismatch"

    print("KERNEL_OK")
</pallas_src>

<mosaic_0001>
module attributes {stable_mosaic.version = 11 : i64} {
  func.func @kernel(%arg0: i32, %arg1: i32, %arg2: memref<1x3x128xf32, #tpu.memory_space<vmem>>, %arg3: memref<8x3xf32, #tpu.memory_space<vmem>>, %arg4: memref<16x8xf32, #tpu.memory_space<vmem>>, %arg5: memref<32x16xf32, #tpu.memory_space<vmem>>, %arg6: memref<56x1xf32, #tpu.memory_space<vmem>>, %arg7: memref<1x32x128xf32, #tpu.memory_space<vmem>>) attributes {dimension_semantics = [#tpu.dimension_semantics<parallel>, #tpu.dimension_semantics<parallel>], iteration_bounds = array<i64: 2, 1>, scalar_prefetch = 0 : i64, scratch_operands = 0 : i64, tpu.core_type = #tpu.core_type<tc>, window_params = [{transform_indices = @transform_0, window_bounds = array<i64: 1, 3, 128>}, {pipeline_mode = #tpu.pipeline_mode<synchronous>, transform_indices = @transform_1, window_bounds = array<i64: 8, 3>}, {pipeline_mode = #tpu.pipeline_mode<synchronous>, transform_indices = @transform_2, window_bounds = array<i64: 16, 8>}, {pipeline_mode = #tpu.pipeline_mode<synchronous>, transform_indices = @transform_3, window_bounds = array<i64: 32, 16>}, {pipeline_mode = #tpu.pipeline_mode<synchronous>, transform_indices = @transform_4, window_bounds = array<i64: 56, 1>}, {transform_indices = @transform_5, window_bounds = array<i64: 1, 32, 128>}]} {
    %c0 = arith.constant 0 : index
    %c0_0 = arith.constant 0 : index
    %c0_1 = arith.constant 0 : index
    %0 = vector.load %arg2[%c0, %c0_0, %c0_1] : memref<1x3x128xf32, #tpu.memory_space<vmem>>, vector<1x3x128xf32>
    %1 = vector.shape_cast %0 : vector<1x3x128xf32> to vector<3x128xf32>
    %c0_2 = arith.constant 0 : index
    %c0_3 = arith.constant 0 : index
    %2 = vector.load %arg3[%c0_2, %c0_3] : memref<8x3xf32, #tpu.memory_space<vmem>>, vector<8x3xf32>
    %c0_4 = arith.constant 0 : index
    %c0_5 = arith.constant 0 : index
    %3 = vector.load %arg6[%c0_4, %c0_5] : memref<56x1xf32, #tpu.memory_space<vmem>>, vector<8x1xf32>
    %4 = vector.extract_strided_slice %2 {offsets = [0, 0], sizes = [8, 1], strides = [1, 1]} : vector<8x3xf32> to vector<8x1xf32>
    %5 = vector.extract_strided_slice %1 {offsets = [0, 0], sizes = [1, 128], strides = [1, 1]} : vector<3x128xf32> to vector<1x128xf32>
    %6 = vector.broadcast %4 : vector<8x1xf32> to vector<8x128xf32>
    %7 = vector.broadcast %5 : vector<1x128xf32> to vector<8x128xf32>
    %8 = arith.mulf %6, %7 : vector<8x128xf32>
    %9 = vector.extract_strided_slice %2 {offsets = [0, 1], sizes = [8, 1], strides = [1, 1]} : vector<8x3xf32> to vector<8x1xf32>
    %10 = vector.extract_strided_slice %1 {offsets = [1, 0], sizes = [1, 128], strides = [1, 1]} : vector<3x128xf32> to vector<1x128xf32>
    %11 = vector.broadcast %9 : vector<8x1xf32> to vector<8x128xf32>
    %12 = vector.broadcast %10 : vector<1x128xf32> to vector<8x128xf32>
    %13 = arith.mulf %11, %12 : vector<8x128xf32>
    %14 = arith.addf %8, %13 : vector<8x128xf32>
    %15 = vector.extract_strided_slice %2 {offsets = [0, 2], sizes = [8, 1], strides = [1, 1]} : vector<8x3xf32> to vector<8x1xf32>
    %16 = vector.extract_strided_slice %1 {offsets = [2, 0], sizes = [1, 128], strides = [1, 1]} : vector<3x128xf32> to vector<1x128xf32>
    %17 = vector.broadcast %15 : vector<8x1xf32> to vector<8x128xf32>
    %18 = vector.broadcast %16 : vector<1x128xf32> to vector<8x128xf32>
    %19 = arith.mulf %17, %18 : vector<8x128xf32>
    %20 = arith.addf %14, %19 : vector<8x128xf32>
    %21 = vector.broadcast %3 : vector<8x1xf32> to vector<8x128xf32>
    %22 = arith.addf %20, %21 : vector<8x128xf32>
    %cst = arith.constant 0.000000e+00 : f32
    %23 = vector.broadcast %cst : f32 to vector<8x128xf32>
    %24 = arith.maximumf %22, %23 : vector<8x128xf32>
    %c0_6 = arith.constant 0 : index
    %c0_7 = arith.constant 0 : index
    %25 = vector.load %arg4[%c0_6, %c0_7] : memref<16x8xf32, #tpu.memory_space<vmem>>, vector<16x8xf32>
    %c8 = arith.constant 8 : index
    %c0_8 = arith.constant 0 : index
    %26 = vector.load %arg6[%c8, %c0_8] : memref<56x1xf32, #tpu.memory_space<vmem>>, vector<16x1xf32>
    %cst_9 = arith.constant dense<0.000000e+00> : vector<16x128xf32>
    %27 = tpu.matmul %25, %24, %cst_9 {dimension_numbers = #tpu.dot_dimension_numbers<[1], [0], [0], [1], [0, 0, 1, 1], [], []>} : vector<16x8xf32>, vector<8x128xf32>, vector<16x128xf32> -> vector<16x128xf32>
    %28 = vector.broadcast %26 : vector<16x1xf32> to vector<16x128xf32>
    %29 = arith.addf %27, %28 : vector<16x128xf32>
    %cst_10 = arith.constant 0.000000e+00 : f32
    %30 = vector.broadcast %cst_10 : f32 to vector<16x128xf32>
    %31 = arith.maximumf %29, %30 : vector<16x128xf32>
    %c0_11 = arith.constant 0 : index
    %c0_12 = arith.constant 0 : index
    %32 = vector.load %arg5[%c0_11, %c0_12] : memref<32x16xf32, #tpu.memory_space<vmem>>, vector<32x16xf32>
    %c24 = arith.constant 24 : index
    %c0_13 = arith.constant 0 : index
    %33 = vector.load %arg6[%c24, %c0_13] : memref<56x1xf32, #tpu.memory_space<vmem>>, vector<32x1xf32>
    %cst_14 = arith.constant dense<0.000000e+00> : vector<32x128xf32>
    %34 = tpu.matmul %32, %31, %cst_14 {dimension_numbers = #tpu.dot_dimension_numbers<[1], [0], [0], [1], [0, 0, 1, 1], [], []>} : vector<32x16xf32>, vector<16x128xf32>, vector<32x128xf32> -> vector<32x128xf32>
    %35 = vector.broadcast %33 : vector<32x1xf32> to vector<32x128xf32>
    %36 = arith.addf %34, %35 : vector<32x128xf32>
    %c0_15 = arith.constant 0 : index
    %c0_16 = arith.constant 0 : index
    %c0_17 = arith.constant 0 : index
    %37 = vector.load %arg7[%c0_15, %c0_16, %c0_17] : memref<1x32x128xf32, #tpu.memory_space<vmem>>, vector<1x32x128xf32>
    %38 = vector.shape_cast %37 : vector<1x32x128xf32> to vector<32x128xf32>
    %39 = vector.shape_cast %36 : vector<32x128xf32> to vector<1x32x128xf32>
    tpu.vector_store %arg7[%c0_15, %c0_16, %c0_17], %39 {strides = array<i32>} : memref<1x32x128xf32, #tpu.memory_space<vmem>>, vector<1x32x128xf32>,
    return
  }
  func.func @transform_0(%arg0: i32, %arg1: i32) -> (i32, i32, i32) {
    %c0_i32 = arith.constant 0 : i32
    %c0_i32_0 = arith.constant 0 : i32
    return %arg0, %c0_i32, %arg1 : i32, i32, i32
  }
  func.func @transform_1(%arg0: i32, %arg1: i32) -> (i32, i32) {
    %c0_i32 = arith.constant 0 : i32
    %c0_i32_0 = arith.constant 0 : i32
    %c0_i32_1 = arith.constant 0 : i32
    return %c0_i32, %c0_i32_0 : i32, i32
  }
  func.func @transform_2(%arg0: i32, %arg1: i32) -> (i32, i32) {
    %c0_i32 = arith.constant 0 : i32
    %c0_i32_0 = arith.constant 0 : i32
    %c0_i32_1 = arith.constant 0 : i32
    return %c0_i32, %c0_i32_0 : i32, i32
  }
  func.func @transform_3(%arg0: i32, %arg1: i32) -> (i32, i32) {
    %c0_i32 = arith.constant 0 : i32
    %c0_i32_0 = arith.constant 0 : i32
    %c0_i32_1 = arith.constant 0 : i32
    return %c0_i32, %c0_i32_0 : i32, i32
  }
  func.func @transform_4(%arg0: i32, %arg1: i32) -> (i32, i32) {
    %c0_i32 = arith.constant 0 : i32
    %c0_i32_0 = arith.constant 0 : i32
    %c0_i32_1 = arith.constant 0 : i32
    return %c0_i32, %c0_i32_0 : i32, i32
  }
  func.func @transform_5(%arg0: i32, %arg1: i32) -> (i32, i32, i32) {
    %c0_i32 = arith.constant 0 : i32
    %c0_i32_0 = arith.constant 0 : i32
    return %arg0, %c0_i32, %arg1 : i32, i32, i32
  }
}

</mosaic_0001>

<llo_original>
// kernel: tpu_custom_call.1
$region0: #{tpu_custom_call.1}
  #allocation0 [shape = 'u32[]', space=smem, size = 0x4, offset = 0x4, fixed_abs, tag = 'smem constant byte address 0x4 - core index']
  #allocation1 [shape = 'u32[144,128]{1,0:T(1,128)}', space=vmem, size = 0x12000, scoped, tag = 'internal scratch']
  %s0 = inlined_call_operand.vmem [shape: f32[2,3,128], index: 0, kind: input, shape index: {}]
  %s1 = inlined_call_operand.vmem [shape: f32[8,3], index: 1, kind: input, shape index: {}]
  %s2 = inlined_call_operand.vmem [shape: f32[16,8], index: 2, kind: input, shape index: {}]
  %s3 = inlined_call_operand.vmem [shape: f32[32,16], index: 3, kind: input, shape index: {}]
  %s4 = inlined_call_operand.vmem [shape: f32[56,1], index: 4, kind: input, shape index: {}]
  %s5 = inlined_call_operand.hbm [shape: f32[2,32,128], index: 5, kind: output, shape index: {}]
  %s6 = sld [smem:[#allocation0]]
  $region53: #{tpu_custom_call.1} parent=0
    _
  %s8 = ssub.s32 1, %s6
  %s9 = scalar_select 0, %s8, %s6
  $region1: #{tpu_custom_call.1} parent=0
    #allocation2 [shape = 'u8[32768]{0}', space=vmem, size = 0x8000, scoped, tag = 'output window, operand 0']
    #allocation3 [shape = 's32[2]{0}', space=sflag, size = 0x8, scoped, tag = 'scoped memory for tpu_custom_call.1']
    %10 = vsyncpa [#allocation3], 0
    %s11 = scalar_lea.sflag [#allocation3], 1
    %12 = vsyncpa %s11, 0
    loop: start=0, step=1, limit=4
    $region2: #{tpu_custom_call.1} parent=1 // loop_pre_header
      _
    $region3: #{tpu_custom_call.1} parent=1 // loop_header
      %s14 = sphi 0, %s18
      %p15 = scmp.ge.s32.totalorder %s14, 4
      %s21 = sphi 0, %s33
      %s22 = sphi 0, %s29
      %s23 = sphi 0, %s21
      %s24 = sphi 0, %s22
      %s25 = sphi 0, %s23
      %s26 = sphi 0, %s24
      %s38 = sphi 0, %s40
      %s41 = sphi 0, %s38
      %s42 = sphi 0, %s41
      %s58 = sphi 0, %s42
      %s62 = sphi 0, %s62
      %s64 = sphi 0, %s62
      %s65 = sphi 0, %s64
      %s79 = sphi 0, %s65
      %s83 = sphi 0, %s83
      %s85 = sphi 0, %s83
      %s86 = sphi 0, %s85
      %s100 = sphi 0, %s86
      %s104 = sphi 0, %s104
      %s106 = sphi 0, %s104
      %s107 = sphi 0, %s106
      %s121 = sphi 0, %s107
      %s125 = sphi 0, %s125
      %s127 = sphi 0, %s125
      %s128 = sphi 0, %s127
      %s142 = sphi 0, %s128
      %s150 = sphi 0, %s152
      %s153 = sphi 0, %s150
      %s154 = sphi 0, %s153
      %s170 = sphi 0, %s154
    $region4: #{tpu_custom_call.1} parent=1 // loop_header_branch
      %17 = sbr.rel (%p15) target = $region8
    $region5: #{tpu_custom_call.1} parent=1 // loop_body
      %s19 = ssub.s32 %s14, 1
      %s20 = ssub.s32 %s14, 2
      %s27 = sadd.s32 1, %s22
      %p28 = scmp.ge.s32.totalorder %s27, 1
      %s29 = scalar_select %p28, 0, %s27
      %s30 = sadd.s32 1, %s21
      %s31 = scalar_select %p28, %s30, %s21
      %p32 = scmp.ge.s32.totalorder %s31, 2
      %s33 = scalar_select %p32, 0, %s31
      %s34 = ssub.s32 %s21, %s33
      %s35 = ssub.s32 %s22, %s29
      %s36 = sor.u32 %s34, %s35
      %p37 = scmp.eq.s32.totalorder %s36, 0
      %s39 = sadd.s32 %s38, 1
      %s40 = scalar_select %p37, %s38, %s39
      %p43 = pneg %p37
      %p44 = scmp.eq.s32.totalorder %s14, 1
      %p45 = por %p43, %p44
      %p46 = scmp.ne.s32.totalorder %s38, %s41
      %p47 = scmp.eq.s32.totalorder %s14, 0
      %p48 = por %p46, %p47
      %p49 = scmp.ne.s32.totalorder %s38, %s41
      %p50 = scmp.eq.s32.totalorder %s19, 1
      %p51 = por %p49, %p50
      %p52 = scmp.ne.s32.totalorder %s41, %s42
      %p53 = scmp.eq.s32.totalorder %s19, 0
      %p54 = por %p52, %p53
      %p55 = scmp.ne.s32.totalorder %s41, %s42
      %p56 = scmp.eq.s32.totalorder %s20, 1
      %p57 = por %p55, %p56
      %p59 = scmp.ne.s32.totalorder %s42, %s58
      %p60 = scmp.eq.s32.totalorder %s20, 0
      %p61 = por %p59, %p60
      %s63 = sadd.s32 %s62, 1
      %p66 = scmp.eq.s32.totalorder %s14, 1
      %p67 = scmp.ne.s32.totalorder %s62, %s64
      %p68 = scmp.eq.s32.totalorder %s14, 0
      %p69 = por %p67, %p68
      %p70 = scmp.ne.s32.totalorder %s62, %s64
      %p71 = scmp.eq.s32.totalorder %s19, 1
      %p72 = por %p70, %p71
      %p73 = scmp.ne.s32.totalorder %s64, %s65
      %p74 = scmp.eq.s32.totalorder %s19, 0
      %p75 = por %p73, %p74
      %p76 = scmp.ne.s32.totalorder %s64, %s65
      %p77 = scmp.eq.s32.totalorder %s20, 1
      %p78 = por %p76, %p77
      %p80 = scmp.ne.s32.totalorder %s65, %s79
      %p81 = scmp.eq.s32.totalorder %s20, 0
      %p82 = por %p80, %p81
      %s84 = sadd.s32 %s83, 1
      %p87 = scmp.eq.s32.totalorder %s14, 1
      %p88 = scmp.ne.s32.totalorder %s83, %s85
      %p89 = scmp.eq.s32.totalorder %s14, 0
      %p90 = por %p88, %p89
      %p91 = scmp.ne.s32.totalorder %s83, %s85
      %p92 = scmp.eq.s32.totalorder %s19, 1
      %p93 = por %p91, %p92
      %p94 = scmp.ne.s32.totalorder %s85, %s86
      %p95 = scmp.eq.s32.totalorder %s19, 0
      %p96 = por %p94, %p95
      %p97 = scmp.ne.s32.totalorder %s85, %s86
      %p98 = scmp.eq.s32.totalorder %s20, 1
      %p99 = por %p97, %p98
      %p101 = scmp.ne.s32.totalorder %s86, %s100
      %p102 = scmp.eq.s32.totalorder %s20, 0
      %p103 = por %p101, %p102
      %s105 = sadd.s32 %s104, 1
      %p108 = scmp.eq.s32.totalorder %s14, 1
      %p109 = scmp.ne.s32.totalorder %s104, %s106
      %p110 = scmp.eq.s32.totalorder %s14, 0
      %p111 = por %p109, %p110
      %p112 = scmp.ne.s32.totalorder %s104, %s106
      %p113 = scmp.eq.s32.totalorder %s19, 1
      %p114 = por %p112, %p113
      %p115 = scmp.ne.s32.totalorder %s106, %s107
      %p116 = scmp.eq.s32.totalorder %s19, 0
      %p117 = por %p115, %p116
      %p118 = scmp.ne.s32.totalorder %s106, %s107
      %p119 = scmp.eq.s32.totalorder %s20, 1
      %p120 = por %p118, %p119
      %p122 = scmp.ne.s32.totalorder %s107, %s121
      %p123 = scmp.eq.s32.totalorder %s20, 0
      %p124 = por %p122, %p123
      %s126 = sadd.s32 %s125, 1
      %p129 = scmp.eq.s32.totalorder %s14, 1
      %p130 = scmp.ne.s32.totalorder %s125, %s127
      %p131 = scmp.eq.s32.totalorder %s14, 0
      %p132 = por %p130, %p131
      %p133 = scmp.ne.s32.totalorder %s125, %s127
      %p134 = scmp.eq.s32.totalorder %s19, 1
      %p135 = por %p133, %p134
      %p136 = scmp.ne.s32.totalorder %s127, %s128
      %p137 = scmp.eq.s32.totalorder %s19, 0
      %p138 = por %p136, %p137
      %p139 = scmp.ne.s32.totalorder %s127, %s128
      %p140 = scmp.eq.s32.totalorder %s20, 1
      %p141 = por %p139, %p140
      %p143 = scmp.ne.s32.totalorder %s128, %s142
      %p144 = scmp.eq.s32.totalorder %s20, 0
      %p145 = por %p143, %p144
      %s146 = ssub.s32 %s21, %s33
      %s147 = ssub.s32 %s22, %s29
      %s148 = sor.u32 %s146, %s147
      %p149 = scmp.eq.s32.totalorder %s148, 0
      %s151 = sadd.s32 %s150, 1
      %s152 = scalar_select %p149, %s150, %s151
      %p155 = pneg %p149
      %p156 = scmp.eq.s32.totalorder %s14, 1
      %p157 = por %p155, %p156
      %p158 = scmp.ne.s32.totalorder %s150, %s153
      %p159 = scmp.eq.s32.totalorder %s14, 0
      %p160 = por %p158, %p159
      %p161 = scmp.ne.s32.totalorder %s150, %s153
      %p162 = scmp.eq.s32.totalorder %s19, 1
      %p163 = por %p161, %p162
      %p164 = scmp.ne.s32.totalorder %s153, %s154
      %p165 = scmp.eq.s32.totalorder %s19, 0
      %p166 = por %p164, %p165
      %p167 = scmp.ne.s32.totalorder %s153, %s154
      %p168 = scmp.eq.s32.totalorder %s20, 1
      %p169 = por %p167, %p168
      %p171 = scmp.ne.s32.totalorder %s154, %s170
      %p172 = scmp.eq.s32.totalorder %s20, 0
      %p173 = por %p171, %p172
      %p174 = scmp.le.s32.totalorder 1, %s14
      %p175 = scmp.lt.s32.totalorder %s14, 3
      %p176 = pnand %p174, %p175
      %p177 = pneg %p176
      // Predicated region
      $region9: #{tpu_custom_call.1} parent=5 // pred_check
        _
      $region10: #{tpu_custom_call.1} parent=5 // pred_check_branch
        %179 = sbr.rel (%p176) target = $region12
      $region11: #{tpu_custom_call.1} parent=5 // pred_region
        %s180 = ssub.s32 %s14, 1
        // Predicated region
        $region13: #{tpu_custom_call.1} parent=11 // pred_check
          %p181 = pneg %p75
        $region14: #{tpu_custom_call.1} parent=11 // pred_check_branch
          %183 = sbr.rel (%p181) target = $region16
        $region15: #{tpu_custom_call.1} parent=11 // pred_region
          _
        $region16: #{tpu_custom_call.1} parent=11 // pred_fallthru
          _
        // Predicated region
        $region17: #{tpu_custom_call.1} parent=11 // pred_check
          %p184 = pneg %p96
        $region18: #{tpu_custom_call.1} parent=11 // pred_check_branch
          %186 = sbr.rel (%p184) target = $region20
        $region19: #{tpu_custom_call.1} parent=11 // pred_region
          _
        $region20: #{tpu_custom_call.1} parent=11 // pred_fallthru
          _
        // Predicated region
        $region21: #{tpu_custom_call.1} parent=11 // pred_check
          %p187 = pneg %p117
        $region22: #{tpu_custom_call.1} parent=11 // pred_check_branch
          %189 = sbr.rel (%p187) target = $region24
        $region23: #{tpu_custom_call.1} parent=11 // pred_region
          _
        $region24: #{tpu_custom_call.1} parent=11 // pred_fallthru
          _
        // Predicated region
        $region25: #{tpu_custom_call.1} parent=11 // pred_check
          %p190 = pneg %p138
        $region26: #{tpu_custom_call.1} parent=11 // pred_check_branch
          %192 = sbr.rel (%p190) target = $region28
        $region27: #{tpu_custom_call.1} parent=11 // pred_region
          _
        $region28: #{tpu_custom_call.1} parent=11 // pred_fallthru
          _
      $region12: #{tpu_custom_call.1} parent=5 // pred_fallthru
        _
      %p193 = scmp.lt.s32.totalorder %s14, 2
      // Predicated region
      $region29: #{tpu_custom_call.1} parent=5 // pred_check
        %p194 = pneg %p193
      $region30: #{tpu_custom_call.1} parent=5 // pred_check_branch
        %196 = sbr.rel (%p194) target = $region32
      $region31: #{tpu_custom_call.1} parent=5 // pred_region
        // Predicated region
        $region33: #{tpu_custom_call.1} parent=31 // pred_check
          %p197 = pneg %p48
        $region34: #{tpu_custom_call.1} parent=31 // pred_check_branch
          %199 = sbr.rel (%p197) target = $region36
        $region35: #{tpu_custom_call.1} parent=31 // pred_region
          %p200 = scmp.lt.s32.totalorder %s21, 1
          %s201 = scalar_select %p200, %s21, 1
          %p202 = scmp.lt.s32.totalorder %s22, 0
          %s203 = scalar_select %p202, %s22, 0
          %s204 = sadd.s32 %s203, %s201
          %s205 = smul.addr %s204, 4
          %s206 = scalar_lea.vmem %s0, %s205
        $region36: #{tpu_custom_call.1} parent=31 // pred_fallthru
          _
      $region32: #{tpu_custom_call.1} parent=5 // pred_fallthru
        _
      %p207 = scmp.le.s32.totalorder 1, %s14
      %p208 = scmp.lt.s32.totalorder %s14, 3
      %p209 = pnand %p207, %p208
      %p210 = pneg %p209
      // Predicated region
      $region37: #{tpu_custom_call.1} parent=5 // pred_check
        _
      $region38: #{tpu_custom_call.1} parent=5 // pred_check_branch
        %212 = sbr.rel (%p209) target = $region40
      $region39: #{tpu_custom_call.1} parent=5 // pred_region
        %s213 = ssub.s32 %s14, 1
        %p214 = scmp.lt.s32.totalorder %s23, 1
        %s215 = scalar_select %p214, %s23, 1
        %p216 = scmp.lt.s32.totalorder %s24, 0
        %s217 = scalar_select %p216, %s24, 0
        %s218 = sadd.s32 %s217, %s215
        %s219 = smul.addr %s218, 4
        %s220 = scalar_lea.vmem %s0, %s219
        %p221 = pneg %p54
        %p222 = pneg %p51
        %p223 = pneg %p75
        %p224 = pneg %p72
        %p225 = pneg %p96
        %p226 = pneg %p93
        %p227 = pneg %p117
        %p228 = pneg %p114
        %p229 = pneg %p138
        %p230 = pneg %p135
        %p231 = pneg %p166
        %p232 = pneg %p163
        %s233 = sand.u32 %s153, 1
        %s234 = scalar_lea.sflag [#allocation3], %s233
        %s235 = sand.u32 %s153, 1
        %s236 = smul.addr %s235, 32
        %s237 = scalar_lea.vmem [#allocation2], %s236
        %p238 = scmp.lt.s32.totalorder %s23, 1
        %s239 = scalar_select %p238, %s23, 1
        %p240 = scmp.lt.s32.totalorder %s24, 0
        %s241 = scalar_select %p240, %s24, 0
        %s242 = sadd.s32 %s241, %s239
        %s243 = smul.addr %s242, 4
        %s244 = scalar_lea.vmem %s0, %s243
        %v245 = vld [vmem:[%s244] sm:$0x7]
        %v246 = vld [vmem:[%s1] sm:$0xff]
        %v247 = vld [vmem:[%s4] sm:$0xff]
        %249 = vset.pattern.permute.xlu0 0
        %250 = vperm.xlu0 %249, %v246
        %v251 = vpop.permute.xlu0 %250
        %v253 = vlaneseq
        %v254 = vshrl.u32 %v253, 7
        %v255 = vsub.s32 0, %v254
        %v256 = vrot.slane %v245, %v255
        %v257 = vmul.f32 %v251, %v256
        %258 = vset.pattern.permute.xlu0 1
        %259 = vperm.xlu0 %258, %v246
        %v260 = vpop.permute.xlu0 %259
        %v262 = vlaneseq
        %v263 = vshrl.u32 %v262, 7
        %v264 = vsub.s32 1, %v263
        %v265 = vrot.slane %v245, %v264
        %v266 = vmul.f32 %v260, %v265
        %v267 = vadd.f32 %v257, %v266
        %268 = vset.pattern.permute.xlu0 2
        %269 = vperm.xlu0 %268, %v246
        %v270 = vpop.permute.xlu0 %269
        %v272 = vlaneseq
        %v273 = vshrl.u32 %v272, 7
        %v274 = vsub.s32 2, %v273
        %v275 = vrot.slane %v245, %v274
        %v276 = vmul.f32 %v270, %v275
        %v277 = vadd.f32 %v267, %v276
        %279 = vset.pattern.permute.xlu0 0
        %280 = vperm.xlu0 %279, %v247
        %v281 = vpop.permute.xlu0 %280
        %v283 = vadd.f32 %v277, %v281
        %v284 = vmax.f32 %v283, 0.0
        %v285 = vld [vmem:[%s2] sm:$0xff]
        %v286 = vld [vmem:[%s2 + $0x8] sm:$0xff]
        %v287 = vld [vmem:[%s4 + $0x8] sm:$0xff]
        %v288 = vld [vmem:[%s4 + $0x10] sm:$0xff]
        %290 = vset.pattern.permute.xlu0 0
        %291 = vperm.xlu0 %290, %v287
        %v292 = vpop.permute.xlu0 %291
        %295 = vset.pattern.permute.xlu0 0
        %296 = vperm.xlu0 %295, %v288
        %v297 = vpop.permute.xlu0 %296
        %vm299 = vcmask 64512
        %v301 = vsel %vm299, %v285, 0
        %v304 = vsel %vm299, %v286, 0
        %306 = vmatprep.subr.mxu0 0.0
        %307 = vmatpush1.msra.mxu0 %v284
        %308 = vmatprep.subr.mxu0 0.0
        %309 = vmatpush1.msra.mxu0 0.0
        %310 = vmatprep.subr.mxu0 0.0
        %311 = vmatpush1.msra.mxu0 0.0
        %312 = vmatprep.subr.mxu0 0.0
        %313 = vmatpush1.msra.mxu0 0.0
        %314 = vmatprep.subr.mxu0 0.0
        %315 = vmatpush1.msra.mxu0 0.0
        %316 = vmatprep.subr.mxu0 0.0
        %317 = vmatpush1.msra.mxu0 0.0
        %318 = vmatprep.subr.mxu0 0.0
        %319 = vmatpush1.msra.mxu0 0.0
        %320 = vmatprep.subr.mxu0 0.0
        %321 = vmatpush1.msra.mxu0 0.0
        %322 = vmatprep.subr.mxu0 0.0
        %323 = vmatpush1.msra.mxu0 0.0
        %324 = vmatprep.subr.mxu0 0.0
        %325 = vmatpush1.msra.mxu0 0.0
        %326 = vmatprep.subr.mxu0 0.0
        %327 = vmatpush1.msra.mxu0 0.0
        %328 = vmatprep.subr.mxu0 0.0
        %329 = vmatpush1.msra.mxu0 0.0
        %330 = vmatprep.subr.mxu0 0.0
        %331 = vmatpush1.msra.mxu0 0.0
        %332 = vmatprep.subr.mxu0 0.0
        %333 = vmatpush1.msra.mxu0 0.0
        %334 = vmatprep.subr.mxu0 0.0
        %335 = vmatpush1.msra.mxu0 0.0
        %336 = vmatprep.subr.mxu0 0.0
        %337 = vmatpush1.msra.mxu0 0.0
        %338 = vmatprep.subr.mxu0 0.0
        %339 = vmatpush1.msra.mxu0 0.0
        %340 = vmatprep.subr.mxu0 0.0
        %341 = vmatpush1.msra.mxu0 0.0
        %342 = vmatprep.subr.mxu0 0.0
        %343 = vmatpush1.msra.mxu0 0.0
        %344 = vmatprep.subr.mxu0 0.0
        %345 = vmatpush1.msra.mxu0 0.0
        %346 = vmatprep.subr.mxu0 0.0
        %347 = vmatpush1.msra.mxu0 0.0
        %348 = vmatprep.subr.mxu0 0.0
        %349 = vmatpush1.msra.mxu0 0.0
        %350 = vmatprep.subr.mxu0 0.0
        %351 = vmatpush1.msra.mxu0 0.0
        %352 = vmatprep.subr.mxu0 0.0
        %353 = vmatpush1.msra.mxu0 0.0
        %354 = vmatprep.subr.mxu0 0.0
        %355 = vmatpush1.msra.mxu0 0.0
        %356 = vmatprep.subr.mxu0 0.0
        %357 = vmatpush1.msra.mxu0 0.0
        %358 = vmatprep.subr.mxu0 0.0
        %359 = vmatpush1.msra.mxu0 0.0
        %360 = vmatprep.subr.mxu0 0.0
        %361 = vmatpush1.msra.mxu0 0.0
        %362 = vmatprep.subr.mxu0 0.0
        %363 = vmatpush1.msra.mxu0 0.0
        %364 = vmatprep.subr.mxu0 0.0
        %365 = vmatpush1.msra.mxu0 0.0
        %366 = vmatprep.subr.mxu0 0.0
        %367 = vmatpush1.msra.mxu0 0.0
        %368 = vmatprep.subr.mxu0 0.0
        %369 = vmatpush1.msra.mxu0 0.0
        %370 = vmatprep.mubr.f32.mxu0 0.0
        %371 = vmatmul.mubr.f32.gmra.mrb[0].mxu0 %v301
        %v372 = vpop.f32.mrb[0].mxu0
        %v373 = vadd.f32 %v292, %v372
        %v374 = vpop.f32.mrb[0].mxu0
        %375 = vmatprep.mubr.f32.mxu0 0.0
        %376 = vmatmul.mubr.f32.gmra.mrb[0].mxu0 %v304
        %v377 = vpop.f32.mrb[0].mxu0
        %v378 = vadd.f32 %v297, %v377
        %v379 = vpop.f32.mrb[0].mxu0
        %380 = vdwg.mxu0
        %v381 = vmax.f32 %v373, 0.0
        %v382 = vmax.f32 %v378, 0.0
        %v383 = vld [vmem:[%s3] sm:$0xff]
        %v384 = vld [vmem:[%s3 + $0x8] sm:$0xff]
        %v385 = vld [vmem:[%s3 + $0x10] sm:$0xff]
        %v386 = vld [vmem:[%s3 + $0x18] sm:$0xff]
        %v387 = vld [vmem:[%s4 + $0x18] sm:$0xff]
        %v388 = vld [vmem:[%s4 + $0x20] sm:$0xff]
        %v389 = vld [vmem:[%s4 + $0x28] sm:$0xff]
        %v390 = vld [vmem:[%s4 + $0x30] sm:$0xff]
        %392 = vset.pattern.permute.xlu0 0
        %393 = vperm.xlu0 %392, %v387
        %v394 = vpop.permute.xlu0 %393
        %397 = vset.pattern.permute.xlu0 0
        %398 = vperm.xlu0 %397, %v388
        %v399 = vpop.permute.xlu0 %398
        %402 = vset.pattern.permute.xlu0 0
        %403 = vperm.xlu0 %402, %v389
        %v404 = vpop.permute.xlu0 %403
        %407 = vset.pattern.permute.xlu0 0
        %408 = vperm.xlu0 %407, %v390
        %v409 = vpop.permute.xlu0 %408
        %vm411 = vcmask 130048
        %v413 = vsel %vm411, %v383, 0
        %v416 = vsel %vm411, %v384, 0
        %v419 = vsel %vm411, %v385, 0
        %v422 = vsel %vm411, %v386, 0
        %424 = vmatprep.subr.mxu0 0.0
        %425 = vmatpush1.msra.mxu0 %v381
        %426 = vmatprep.subr.mxu0 0.0
        %427 = vmatpush1.msra.mxu0 %v382
        %428 = vmatprep.subr.mxu0 0.0
        %429 = vmatpush1.msra.mxu0 0.0
        %430 = vmatprep.subr.mxu0 0.0
        %431 = vmatpush1.msra.mxu0 0.0
        %432 = vmatprep.subr.mxu0 0.0
        %433 = vmatpush1.msra.mxu0 0.0
        %434 = vmatprep.subr.mxu0 0.0
        %435 = vmatpush1.msra.mxu0 0.0
        %436 = vmatprep.subr.mxu0 0.0
        %437 = vmatpush1.msra.mxu0 0.0
        %438 = vmatprep.subr.mxu0 0.0
        %439 = vmatpush1.msra.mxu0 0.0
        %440 = vmatprep.subr.mxu0 0.0
        %441 = vmatpush1.msra.mxu0 0.0
        %442 = vmatprep.subr.mxu0 0.0
        %443 = vmatpush1.msra.mxu0 0.0
        %444 = vmatprep.subr.mxu0 0.0
        %445 = vmatpush1.msra.mxu0 0.0
        %446 = vmatprep.subr.mxu0 0.0
        %447 = vmatpush1.msra.mxu0 0.0
        %448 = vmatprep.subr.mxu0 0.0
        %449 = vmatpush1.msra.mxu0 0.0
        %450 = vmatprep.subr.mxu0 0.0
        %451 = vmatpush1.msra.mxu0 0.0
        %452 = vmatprep.subr.mxu0 0.0
        %453 = vmatpush1.msra.mxu0 0.0
        %454 = vmatprep.subr.mxu0 0.0
        %455 = vmatpush1.msra.mxu0 0.0
        %456 = vmatprep.subr.mxu0 0.0
        %457 = vmatpush1.msra.mxu0 0.0
        %458 = vmatprep.subr.mxu0 0.0
        %459 = vmatpush1.msra.mxu0 0.0
        %460 = vmatprep.subr.mxu0 0.0
        %461 = vmatpush1.msra.mxu0 0.0
        %462 = vmatprep.subr.mxu0 0.0
        %463 = vmatpush1.msra.mxu0 0.0
        %464 = vmatprep.subr.mxu0 0.0
        %465 = vmatpush1.msra.mxu0 0.0
        %466 = vmatprep.subr.mxu0 0.0
        %467 = vmatpush1.msra.mxu0 0.0
        %468 = vmatprep.subr.mxu0 0.0
        %469 = vmatpush1.msra.mxu0 0.0
        %470 = vmatprep.subr.mxu0 0.0
        %471 = vmatpush1.msra.mxu0 0.0
        %472 = vmatprep.subr.mxu0 0.0
        %473 = vmatpush1.msra.mxu0 0.0
        %474 = vmatprep.subr.mxu0 0.0
        %475 = vmatpush1.msra.mxu0 0.0
        %476 = vmatprep.subr.mxu0 0.0
        %477 = vmatpush1.msra.mxu0 0.0
        %478 = vmatprep.subr.mxu0 0.0
        %479 = vmatpush1.msra.mxu0 0.0
        %480 = vmatprep.subr.mxu0 0.0
        %481 = vmatpush1.msra.mxu0 0.0
        %482 = vmatprep.subr.mxu0 0.0
        %483 = vmatpush1.msra.mxu0 0.0
        %484 = vmatprep.subr.mxu0 0.0
        %485 = vmatpush1.msra.mxu0 0.0
        %486 = vmatprep.subr.mxu0 0.0
        %487 = vmatpush1.msra.mxu0 0.0
        %488 = vmatprep.mubr.f32.mxu0 0.0
        %489 = vmatmul.mubr.f32.gmra.mrb[0].mxu0 %v413
        %v490 = vpop.f32.mrb[0].mxu0
        %v491 = vadd.f32 %v394, %v490
        %v492 = vpop.f32.mrb[0].mxu0
        %493 = vmatprep.mubr.f32.mxu0 0.0
        %494 = vmatmul.mubr.f32.gmra.mrb[0].mxu0 %v416
        %v495 = vpop.f32.mrb[0].mxu0
        %v496 = vadd.f32 %v399, %v495
        %v497 = vpop.f32.mrb[0].mxu0
        %498 = vmatprep.mubr.f32.mxu0 0.0
        %499 = vmatmul.mubr.f32.gmra.mrb[0].mxu0 %v419
        %v500 = vpop.f32.mrb[0].mxu0
        %v501 = vadd.f32 %v404, %v500
        %v502 = vpop.f32.mrb[0].mxu0
        %503 = vmatprep.mubr.f32.mxu0 0.0
        %504 = vmatmul.mubr.f32.gmra.mrb[0].mxu0 %v422
        %v505 = vpop.f32.mrb[0].mxu0
        %v506 = vadd.f32 %v409, %v505
        %v507 = vpop.f32.mrb[0].mxu0
        %508 = vdwg.mxu0
        %509 = vst [vmem:[%s237] sm:$0xff] %v491
        %510 = vst [vmem:[%s237 + $0x8] sm:$0xff] %v496
        %511 = vst [vmem:[%s237 + $0x10] sm:$0xff] %v501
        %512 = vst [vmem:[%s237 + $0x18] sm:$0xff] %v506
        %s513 = sand.u32 %s153, 1
        %s514 = scalar_lea.sflag [#allocation3], %s513
        %s515 = sand.u32 %s153, 1
        %s516 = smul.addr %s515, 32
        %s517 = scalar_lea.vmem [#allocation2], %s516
        // Predicated region
        $region41: #{tpu_custom_call.1} parent=39 // pred_check
          %p518 = pneg %p163
        $region42: #{tpu_custom_call.1} parent=39 // pred_check_branch
          %520 = sbr.rel (%p518) target = $region44
        $region43: #{tpu_custom_call.1} parent=39 // pred_region
          %s522 = ssub.s32 512, 512
          %523 = vsyncadd %s514, %s522
          %s524 = smul.addr %s23, 4
          %s525 = sadd.s32 %s24, %s524
          %s526 = smul.addr %s525, 128
          %s527 = scalar_lea.hbm %s5, %s526
          %s528 = sshll.u32 %s517, 4
          %s529 = int_to_ptr.vmem [resolvable:$true] %s528
          %534 = dma.vmem_to_hbm [thread:$0]  %s529, 512, %s527, %s514, 128, 128, 8
        $region44: #{tpu_custom_call.1} parent=39 // pred_fallthru
          _
      $region40: #{tpu_custom_call.1} parent=5 // pred_fallthru
        _
      %p535 = scmp.le.s32.totalorder 2, %s14
      // Predicated region
      $region45: #{tpu_custom_call.1} parent=5 // pred_check
        %p536 = pneg %p535
      $region46: #{tpu_custom_call.1} parent=5 // pred_check_branch
        %538 = sbr.rel (%p536) target = $region48
      $region47: #{tpu_custom_call.1} parent=5 // pred_region
        %s539 = ssub.s32 %s14, 2
        // Predicated region
        $region49: #{tpu_custom_call.1} parent=47 // pred_check
          %p540 = pneg %p169
        $region50: #{tpu_custom_call.1} parent=47 // pred_check_branch
          %542 = sbr.rel (%p540) target = $region52
        $region51: #{tpu_custom_call.1} parent=47 // pred_region
          %s543 = sand.u32 %s154, 1
          %s544 = scalar_lea.sflag [#allocation3], %s543
          %s545 = sand.u32 %s154, 1
          %s546 = smul.addr %s545, 32
          %s547 = scalar_lea.vmem [#allocation2], %s546
          %548 = dma.done %s544, 512
        $region52: #{tpu_custom_call.1} parent=47 // pred_fallthru
          _
      $region48: #{tpu_custom_call.1} parent=5 // pred_fallthru
        _
    $region6: #{tpu_custom_call.1} parent=1 // loop_footer
      %s18 = sadd.s32 1, %s14
    $region7: #{tpu_custom_call.1} parent=1 // loop_footer_branch
      %13 = sbr.rel target = $region3
    $region8: #{tpu_custom_call.1} parent=1 // loop_exit
      _
    %549 = vsyncpa [#allocation3], 1
    %s550 = scalar_lea.sflag [#allocation3], 1
    %551 = vsyncpa %s550, 1

</llo_original>
